<compile_context>
chip_gen: v7x
topology: tpu7x:2x2x1
jax: 0.10.0
libtpu: 0.0.40
codegen_flags: <defaults>
</compile_context>

<pallas_src>
import functools

import jax
import jax.numpy as jnp
from jax import lax
from jax.experimental import pallas as pl
from jax.experimental.pallas import tpu as pltpu

LANES = 128
MAX_TILE_R = 512   # rows of 128 lanes per grid step (256 KiB f32 / input / step)
NCORES = 2         # leading "parallel" grid axis (uses both TCs on v7x)


def _round_up(a, b):
    return ((a + b - 1) // b) * b


def _loss_sums_kernel(x_ref, t_ref, o_ref, *, n_valid, rows_per_core, tile_r):
    """Accumulates per-lane partial sums of the 6 scalars needed by the loss.

    o_ref block: (1, 8, 128) f32, VMEM-resident across the reduction axis.
      row 0: sum(sigmoid(x))            row 1: sum(t)
      row 2: sum(sigmoid(x) * t)        row 3: sum(BCE elementwise)
      row 4: sum(sigmoid(sigmoid(x)))   row 5: sum(sigmoid(sigmoid(x)) * t)
      rows 6, 7: unused padding
    """
    c = pl.program_id(0)
    i = pl.program_id(1)

    @pl.when(i == 0)
    def _():
        o_ref[...] = jnp.zeros_like(o_ref)

    x = x_ref[0].astype(jnp.float32)
    t = t_ref[0].astype(jnp.float32)

    # In-kernel tail mask: compare each element's global flat index with the
    # true element count (no mask array read from HBM).  Zero out padded /
    # out-of-bounds garbage BEFORE the transcendentals so 0 * inf can never
    # poison the sums.
    row0 = c * rows_per_core + i * tile_r
    row_ids = lax.broadcasted_iota(jnp.int32, (tile_r, LANES), 0)
    lane_ids = lax.broadcasted_iota(jnp.int32, (tile_r, LANES), 1)
    idx = (row0 + row_ids) * LANES + lane_ids
    valid = idx < n_valid
    m = valid.astype(jnp.float32)
    x = jnp.where(valid, x, 0.0)
    t = jnp.where(valid, t, 0.0)

    p1 = 1.0 / (1.0 + jnp.exp(-x))                # sigmoid(x)
    log_p = jnp.maximum(jnp.log(p1), -100.0)      # torch BCE clamps logs at -100
    log_1mp = jnp.maximum(jnp.log1p(-p1), -100.0)
    bce = -(t * log_p + (1.0 - t) * log_1mp)
    p2 = 1.0 / (1.0 + jnp.exp(-p1))               # _iou re-applies sigmoid (quirk kept)

    def rsum(v):
        # Reduce over the sublane/row axis only -> (1, 128) per-lane partials.
        return jnp.sum(v, axis=0, keepdims=True)

    zero = jnp.zeros((1, LANES), jnp.float32)
    partial = jnp.concatenate(
        [rsum(p1 * m), rsum(t), rsum(p1 * t), rsum(bce * m),
         rsum(p2 * m), rsum(p2 * t), zero, zero], axis=0)       # (8, 128)
    o_ref[0] += partial


def _reduce_sums(inputs, targets):
    n = inputs.size
    xf = inputs.reshape(-1)   # keep native dtype; cast inside the kernel
    tf = targets.reshape(-1)

    rows_total = -(-n // LANES)
    rows_per_core = _round_up(-(-rows_total // NCORES), 8)
    n_pad = NCORES * rows_per_core * LANES
    if n_pad != n:
        # TODO(synk): for unaligned sizes this pad is one extra HBM pass; typical
        # NCHW image shapes (size % 2048 == 0) take this copy-free branch's else.
        xf = jnp.pad(xf, (0, n_pad - n))
        tf = jnp.pad(tf, (0, n_pad - n))

    x3 = xf.reshape(NCORES, rows_per_core, LANES)
    t3 = tf.reshape(NCORES, rows_per_core, LANES)

    tile_r = min(MAX_TILE_R, rows_per_core)       # always a multiple of 8
    blocks = -(-rows_per_core // tile_r)

    in_spec = pl.BlockSpec((1, tile_r, LANES), lambda c, i: (c, i, 0))
    out_spec = pl.BlockSpec((1, 8, LANES), lambda c, i: (c, 0, 0))

    kernel = functools.partial(
        _loss_sums_kernel,
        n_valid=n, rows_per_core=rows_per_core, tile_r=tile_r)

    part = pl.pallas_call(
        kernel,
        out_shape=jax.ShapeDtypeStruct((NCORES, 8, LANES), jnp.float32),
        grid_spec=pltpu.PrefetchScalarGridSpec(
            num_scalar_prefetch=0,
            grid=(NCORES, blocks),
            in_specs=[in_spec, in_spec],
            out_specs=out_spec,
        ),
        compiler_params=pltpu.CompilerParams(
            dimension_semantics=("parallel", "arbitrary")),
    )(x3, t3)

    # Single cheap cross-core + cross-lane reduction outside the kernel.
    return jnp.sum(part, axis=(0, 2))   # (8,)


@jax.jit
def dice_bce_iou_loss(inputs, targets, smooth=1.0):
    n = inputs.size
    s = _reduce_sums(inputs, targets)
    sum_p1, sum_t, inter1, bce_sum, sum_p2, inter2 = (
        s[0], s[1], s[2], s[3], s[4], s[5])

    dice_loss = 1.0 - (2.0 * inter1 + smooth) / (sum_p1 + sum_t + smooth)
    bce = bce_sum / n
    union = (sum_p2 + sum_t) - inter2
    iou = 1.0 - (inter2 + smooth) / (union + smooth)

    total = bce + dice_loss + iou
    return total, {"bce": bce, "dice": dice_loss, "iou": iou}


if __name__ == "__main__":
    key = jax.random.PRNGKey(0)
    k1, k2 = jax.random.split(key)
    # logits and binary targets, NCHW like the PyTorch module expects
    x = jax.random.normal(k1, (2, 4, 16, 16), dtype=jnp.float32)
    t = (jax.random.uniform(k2, (2, 4, 16, 16)) > 0.5).astype(jnp.float32)

    total, comps = dice_bce_iou_loss(x, t)
    jax.block_until_ready(total)
    jax.block_until_ready(comps)
    print("KERNEL_OK")
</pallas_src>

<mosaic_0001>
module attributes {stable_mosaic.version = 11 : i64} {
  func.func @_loss_sums_kernel(%arg0: i32, %arg1: i32, %arg2: memref<1x8x128xf32, #tpu.memory_space<vmem>>, %arg3: memref<1x8x128xf32, #tpu.memory_space<vmem>>, %arg4: memref<1x8x128xf32, #tpu.memory_space<vmem>>) attributes {dimension_semantics = [#tpu.dimension_semantics<parallel>, #tpu.dimension_semantics<arbitrary>], iteration_bounds = array<i64: 2, 1>, scalar_prefetch = 0 : i64, scratch_operands = 0 : i64, tpu.core_type = #tpu.core_type<tc>, window_params = [{transform_indices = @transform_0, window_bounds = array<i64: 1, 8, 128>}, {transform_indices = @transform_1, window_bounds = array<i64: 1, 8, 128>}, {transform_indices = @transform_2, window_bounds = array<i64: 1, 8, 128>}]} {
    %c0_i32 = arith.constant 0 : i32
    %0 = arith.cmpi eq, %arg1, %c0_i32 : i32
    %1 = arith.extui %0 : i1 to i32
    %c0_i32_0 = arith.constant 0 : i32
    %2 = arith.cmpi ne, %1, %c0_i32_0 : i32
    scf.if %2 {
      %cst_32 = arith.constant 0.000000e+00 : f32
      %79 = vector.broadcast %cst_32 : f32 to vector<1x8x128xf32>
      %c0_33 = arith.constant 0 : index
      %c0_34 = arith.constant 0 : index
      %c0_35 = arith.constant 0 : index
      %80 = vector.load %arg4[%c0_33, %c0_34, %c0_35] : memref<1x8x128xf32, #tpu.memory_space<vmem>>, vector<1x8x128xf32>
      tpu.vector_store %arg4[%c0_33, %c0_34, %c0_35], %79 {strides = array<i32>} : memref<1x8x128xf32, #tpu.memory_space<vmem>>, vector<1x8x128xf32>,
    } else {
    }
    %c0 = arith.constant 0 : index
    %c0_1 = arith.constant 0 : index
    %c0_2 = arith.constant 0 : index
    %3 = vector.load %arg2[%c0, %c0_1, %c0_2] : memref<1x8x128xf32, #tpu.memory_space<vmem>>, vector<1x8x128xf32>
    %4 = vector.shape_cast %3 : vector<1x8x128xf32> to vector<8x128xf32>
    %c0_3 = arith.constant 0 : index
    %c0_4 = arith.constant 0 : index
    %c0_5 = arith.constant 0 : index
    %5 = vector.load %arg3[%c0_3, %c0_4, %c0_5] : memref<1x8x128xf32, #tpu.memory_space<vmem>>, vector<1x8x128xf32>
    %6 = vector.shape_cast %5 : vector<1x8x128xf32> to vector<8x128xf32>
    %c8_i32 = arith.constant 8 : i32
    %7 = arith.muli %arg0, %c8_i32 : i32
    %c8_i32_6 = arith.constant 8 : i32
    %8 = arith.muli %arg1, %c8_i32_6 : i32
    %9 = arith.addi %7, %8 : i32
    %10 = tpu.iota {dimensions = array<i32: 0>} : vector<8x128xi32>
    %11 = tpu.iota {dimensions = array<i32: 1>} : vector<8x128xi32>
    %12 = vector.broadcast %9 : i32 to vector<8x128xi32>
    %13 = arith.addi %12, %10 : vector<8x128xi32>
    %c128_i32 = arith.constant 128 : i32
    %14 = vector.broadcast %c128_i32 : i32 to vector<8x128xi32>
    %15 = arith.muli %13, %14 : vector<8x128xi32>
    %16 = arith.addi %15, %11 : vector<8x128xi32>
    %c2048_i32 = arith.constant 2048 : i32
    %17 = vector.broadcast %c2048_i32 : i32 to vector<8x128xi32>
    %18 = arith.cmpi slt, %16, %17 : vector<8x128xi32>
    %19 = arith.extui %18 : vector<8x128xi1> to vector<8x128xi32>
    %20 = arith.sitofp %19 : vector<8x128xi32> to vector<8x128xf32>
    %cst = arith.constant 0.000000e+00 : f32
    %21 = vector.broadcast %cst : f32 to vector<8x128xf32>
    %22 = arith.select %18, %4, %21 : vector<8x128xi1>, vector<8x128xf32>
    %cst_7 = arith.constant 0.000000e+00 : f32
    %23 = vector.broadcast %cst_7 : f32 to vector<8x128xf32>
    %24 = arith.select %18, %6, %23 : vector<8x128xi1>, vector<8x128xf32>
    %cst_8 = arith.constant 0.000000e+00 : f32
    %25 = vector.broadcast %cst_8 : f32 to vector<8x128xf32>
    %26 = arith.subf %25, %22 : vector<8x128xf32>
    %27 = math.exp %26 : vector<8x128xf32>
    %cst_9 = arith.constant 1.000000e+00 : f32
    %28 = vector.broadcast %cst_9 : f32 to vector<8x128xf32>
    %29 = arith.addf %28, %27 : vector<8x128xf32>
    %cst_10 = arith.constant 1.000000e+00 : f32
    %30 = vector.broadcast %cst_10 : f32 to vector<8x128xf32>
    %31 = arith.divf %30, %29 : vector<8x128xf32>
    %32 = math.log %31 : vector<8x128xf32>
    %cst_11 = arith.constant -1.000000e+02 : f32
    %33 = vector.broadcast %cst_11 : f32 to vector<8x128xf32>
    %34 = arith.maximumf %32, %33 : vector<8x128xf32>
    %cst_12 = arith.constant 0.000000e+00 : f32
    %35 = vector.broadcast %cst_12 : f32 to vector<8x128xf32>
    %36 = arith.subf %35, %31 : vector<8x128xf32>
    %37 = math.log1p %36 : vector<8x128xf32>
    %cst_13 = arith.constant -1.000000e+02 : f32
    %38 = vector.broadcast %cst_13 : f32 to vector<8x128xf32>
    %39 = arith.maximumf %37, %38 : vector<8x128xf32>
    %40 = arith.mulf %24, %34 : vector<8x128xf32>
    %cst_14 = arith.constant 1.000000e+00 : f32
    %41 = vector.broadcast %cst_14 : f32 to vector<8x128xf32>
    %42 = arith.subf %41, %24 : vector<8x128xf32>
    %43 = arith.mulf %42, %39 : vector<8x128xf32>
    %44 = arith.addf %40, %43 : vector<8x128xf32>
    %cst_15 = arith.constant 0.000000e+00 : f32
    %45 = vector.broadcast %cst_15 : f32 to vector<8x128xf32>
    %46 = arith.subf %45, %44 : vector<8x128xf32>
    %cst_16 = arith.constant 0.000000e+00 : f32
    %47 = vector.broadcast %cst_16 : f32 to vector<8x128xf32>
    %48 = arith.subf %47, %31 : vector<8x128xf32>
    %49 = math.exp %48 : vector<8x128xf32>
    %cst_17 = arith.constant 1.000000e+00 : f32
    %50 = vector.broadcast %cst_17 : f32 to vector<8x128xf32>
    %51 = arith.addf %50, %49 : vector<8x128xf32>
    %cst_18 = arith.constant 1.000000e+00 : f32
    %52 = vector.broadcast %cst_18 : f32 to vector<8x128xf32>
    %53 = arith.divf %52, %51 : vector<8x128xf32>
    %cst_19 = arith.constant 0.000000e+00 : f32
    %54 = vector.broadcast %cst_19 : f32 to vector<1x128xf32>
    %55 = arith.mulf %31, %20 : vector<8x128xf32>
    %cst_20 = arith.constant dense<0.000000e+00> : vector<128xf32>
    %56 = vector.multi_reduction <add>, %55, %cst_20 [0] : vector<8x128xf32> to vector<128xf32>
    %57 = vector.shape_cast %56 : vector<128xf32> to vector<1x128xf32>
    %cst_21 = arith.constant dense<0.000000e+00> : vector<128xf32>
    %58 = vector.multi_reduction <add>, %24, %cst_21 [0] : vector<8x128xf32> to vector<128xf32>
    %59 = vector.shape_cast %58 : vector<128xf32> to vector<1x128xf32>
    %60 = arith.mulf %31, %24 : vector<8x128xf32>
    %cst_22 = arith.constant dense<0.000000e+00> : vector<128xf32>
    %61 = vector.multi_reduction <add>, %60, %cst_22 [0] : vector<8x128xf32> to vector<128xf32>
    %62 = vector.shape_cast %61 : vector<128xf32> to vector<1x128xf32>
    %63 = arith.mulf %46, %20 : vector<8x128xf32>
    %cst_23 = arith.constant dense<0.000000e+00> : vector<128xf32>
    %64 = vector.multi_reduction <add>, %63, %cst_23 [0] : vector<8x128xf32> to vector<128xf32>
    %65 = vector.shape_cast %64 : vector<128xf32> to vector<1x128xf32>
    %66 = arith.mulf %53, %20 : vector<8x128xf32>
    %cst_24 = arith.constant dense<0.000000e+00> : vector<128xf32>
    %67 = vector.multi_reduction <add>, %66, %cst_24 [0] : vector<8x128xf32> to vector<128xf32>
    %68 = vector.shape_cast %67 : vector<128xf32> to vector<1x128xf32>
    %69 = arith.mulf %53, %24 : vector<8x128xf32>
    %cst_25 = arith.constant dense<0.000000e+00> : vector<128xf32>
    %70 = vector.multi_reduction <add>, %69, %cst_25 [0] : vector<8x128xf32> to vector<128xf32>
    %71 = vector.shape_cast %70 : vector<128xf32> to vector<1x128xf32>
    %72 = tpu.concatenate %57, %59, %62, %65, %68, %71, %54, %54 in 0 : vector<1x128xf32>, vector<1x128xf32>, vector<1x128xf32>, vector<1x128xf32>, vector<1x128xf32>, vector<1x128xf32>, vector<1x128xf32>, vector<1x128xf32> -> vector<8x128xf32>
    %c0_26 = arith.constant 0 : index
    %c0_27 = arith.constant 0 : index
    %c0_28 = arith.constant 0 : index
    %73 = vector.load %arg4[%c0_26, %c0_27, %c0_28] : memref<1x8x128xf32, #tpu.memory_space<vmem>>, vector<1x8x128xf32>
    %74 = vector.shape_cast %73 : vector<1x8x128xf32> to vector<8x128xf32>
    %75 = arith.addf %74, %72 : vector<8x128xf32>
    %c0_29 = arith.constant 0 : index
    %c0_30 = arith.constant 0 : index
    %c0_31 = arith.constant 0 : index
    %76 = vector.load %arg4[%c0_29, %c0_30, %c0_31] : memref<1x8x128xf32, #tpu.memory_space<vmem>>, vector<1x8x128xf32>
    %77 = vector.shape_cast %76 : vector<1x8x128xf32> to vector<8x128xf32>
    %78 = vector.shape_cast %75 : vector<8x128xf32> to vector<1x8x128xf32>
    tpu.vector_store %arg4[%c0_29, %c0_30, %c0_31], %78 {strides = array<i32>} : memref<1x8x128xf32, #tpu.memory_space<vmem>>, vector<1x8x128xf32>,
    return
  }
  func.func @transform_0(%arg0: i32, %arg1: i32) -> (i32, i32, i32) {
    %c0_i32 = arith.constant 0 : i32
    %c0_i32_0 = arith.constant 0 : i32
    return %arg0, %arg1, %c0_i32 : i32, i32, i32
  }
  func.func @transform_1(%arg0: i32, %arg1: i32) -> (i32, i32, i32) {
    %c0_i32 = arith.constant 0 : i32
    %c0_i32_0 = arith.constant 0 : i32
    return %arg0, %arg1, %c0_i32 : i32, i32, i32
  }
  func.func @transform_2(%arg0: i32, %arg1: i32) -> (i32, i32, i32) {
    %c0_i32 = arith.constant 0 : i32
    %c0_i32_0 = arith.constant 0 : i32
    %c0_i32_1 = arith.constant 0 : i32
    return %arg0, %c0_i32, %c0_i32_0 : i32, i32, i32
  }
}

</mosaic_0001>

<llo_original>
// kernel: dice_bce_iou_loss.1
$region0: #{dice_bce_iou_loss.1}
  #allocation0 [shape = 'u32[]', space=smem, size = 0x4, offset = 0x4, fixed_abs, tag = 'smem constant byte address 0x4 - core index']
  #allocation1 [shape = 'u32[144,128]{1,0:T(1,128)}', space=vmem, size = 0x12000, scoped, tag = 'internal scratch']
  %s0 = inlined_call_operand.vmem [shape: f32[2,8,128], index: 0, kind: input, shape index: {}]
  %s1 = inlined_call_operand.vmem [shape: f32[2,8,128], index: 1, kind: input, shape index: {}]
  %s2 = inlined_call_operand.vmem [shape: f32[2,8,128], index: 2, kind: output, shape index: {}]
  %s3 = sld [smem:[#allocation0]]
  $region45: #{dice_bce_iou_loss.1} parent=0
    _
  %s5 = ssub.s32 1, %s3
  %s6 = scalar_select 0, %s5, %s3
  loop: start=0, step=1, limit=4
  $region2: #{dice_bce_iou_loss.1} parent=0 // loop_pre_header
    _
  $region3: #{dice_bce_iou_loss.1} parent=0 // loop_header
    %s8 = sphi 0, %s12
    %p9 = scmp.ge.s32.totalorder %s8, 4
    %s15 = sphi 0, %s27
    %s16 = sphi 0, %s23
    %s17 = sphi 0, %s15
    %s18 = sphi 0, %s16
    %s19 = sphi 0, %s17
    %s20 = sphi 0, %s18
    %s32 = sphi 0, %s34
    %s35 = sphi 0, %s32
    %s36 = sphi 0, %s35
    %s52 = sphi 0, %s36
    %s60 = sphi 0, %s62
    %s63 = sphi 0, %s60
    %s64 = sphi 0, %s63
    %s80 = sphi 0, %s64
    %s86 = sphi 0, %s88
    %s89 = sphi 0, %s86
    %s90 = sphi 0, %s89
    %s106 = sphi 0, %s90
  $region4: #{dice_bce_iou_loss.1} parent=0 // loop_header_branch
    %11 = sbr.rel (%p9) target = $region8
  $region5: #{dice_bce_iou_loss.1} parent=0 // loop_body
    %s13 = ssub.s32 %s8, 1
    %s14 = ssub.s32 %s8, 2
    %s21 = sadd.s32 1, %s16
    %p22 = scmp.ge.s32.totalorder %s21, 1
    %s23 = scalar_select %p22, 0, %s21
    %s24 = sadd.s32 1, %s15
    %s25 = scalar_select %p22, %s24, %s15
    %p26 = scmp.ge.s32.totalorder %s25, 2
    %s27 = scalar_select %p26, 0, %s25
    %s28 = ssub.s32 %s15, %s27
    %s29 = ssub.s32 %s16, %s23
    %s30 = sor.u32 %s28, %s29
    %p31 = scmp.eq.s32.totalorder %s30, 0
    %s33 = sadd.s32 %s32, 1
    %s34 = scalar_select %p31, %s32, %s33
    %p37 = pneg %p31
    %p38 = scmp.eq.s32.totalorder %s8, 1
    %p39 = por %p37, %p38
    %p40 = scmp.ne.s32.totalorder %s32, %s35
    %p41 = scmp.eq.s32.totalorder %s8, 0
    %p42 = por %p40, %p41
    %p43 = scmp.ne.s32.totalorder %s32, %s35
    %p44 = scmp.eq.s32.totalorder %s13, 1
    %p45 = por %p43, %p44
    %p46 = scmp.ne.s32.totalorder %s35, %s36
    %p47 = scmp.eq.s32.totalorder %s13, 0
    %p48 = por %p46, %p47
    %p49 = scmp.ne.s32.totalorder %s35, %s36
    %p50 = scmp.eq.s32.totalorder %s14, 1
    %p51 = por %p49, %p50
    %p53 = scmp.ne.s32.totalorder %s36, %s52
    %p54 = scmp.eq.s32.totalorder %s14, 0
    %p55 = por %p53, %p54
    %s56 = ssub.s32 %s15, %s27
    %s57 = ssub.s32 %s16, %s23
    %s58 = sor.u32 %s56, %s57
    %p59 = scmp.eq.s32.totalorder %s58, 0
    %s61 = sadd.s32 %s60, 1
    %s62 = scalar_select %p59, %s60, %s61
    %p65 = pneg %p59
    %p66 = scmp.eq.s32.totalorder %s8, 1
    %p67 = por %p65, %p66
    %p68 = scmp.ne.s32.totalorder %s60, %s63
    %p69 = scmp.eq.s32.totalorder %s8, 0
    %p70 = por %p68, %p69
    %p71 = scmp.ne.s32.totalorder %s60, %s63
    %p72 = scmp.eq.s32.totalorder %s13, 1
    %p73 = por %p71, %p72
    %p74 = scmp.ne.s32.totalorder %s63, %s64
    %p75 = scmp.eq.s32.totalorder %s13, 0
    %p76 = por %p74, %p75
    %p77 = scmp.ne.s32.totalorder %s63, %s64
    %p78 = scmp.eq.s32.totalorder %s14, 1
    %p79 = por %p77, %p78
    %p81 = scmp.ne.s32.totalorder %s64, %s80
    %p82 = scmp.eq.s32.totalorder %s14, 0
    %p83 = por %p81, %p82
    %s84 = ssub.s32 %s15, %s27
    %p85 = scmp.eq.s32.totalorder %s84, 0
    %s87 = sadd.s32 %s86, 1
    %s88 = scalar_select %p85, %s86, %s87
    %p91 = pneg %p85
    %p92 = scmp.eq.s32.totalorder %s8, 1
    %p93 = por %p91, %p92
    %p94 = scmp.ne.s32.totalorder %s86, %s89
    %p95 = scmp.eq.s32.totalorder %s8, 0
    %p96 = por %p94, %p95
    %p97 = scmp.ne.s32.totalorder %s86, %s89
    %p98 = scmp.eq.s32.totalorder %s13, 1
    %p99 = por %p97, %p98
    %p100 = scmp.ne.s32.totalorder %s89, %s90
    %p101 = scmp.eq.s32.totalorder %s13, 0
    %p102 = por %p100, %p101
    %p103 = scmp.ne.s32.totalorder %s89, %s90
    %p104 = scmp.eq.s32.totalorder %s14, 1
    %p105 = por %p103, %p104
    %p107 = scmp.ne.s32.totalorder %s90, %s106
    %p108 = scmp.eq.s32.totalorder %s14, 0
    %p109 = por %p107, %p108
    %p110 = scmp.le.s32.totalorder 1, %s8
    %p111 = scmp.lt.s32.totalorder %s8, 3
    %p112 = pnand %p110, %p111
    %p113 = pneg %p112
    // Predicated region
    $region9: #{dice_bce_iou_loss.1} parent=5 // pred_check
      _
    $region10: #{dice_bce_iou_loss.1} parent=5 // pred_check_branch
      %115 = sbr.rel (%p112) target = $region12
    $region11: #{dice_bce_iou_loss.1} parent=5 // pred_region
      %s116 = ssub.s32 %s8, 1
    $region12: #{dice_bce_iou_loss.1} parent=5 // pred_fallthru
      _
    %p117 = scmp.lt.s32.totalorder %s8, 2
    // Predicated region
    $region13: #{dice_bce_iou_loss.1} parent=5 // pred_check
      %p118 = pneg %p117
    $region14: #{dice_bce_iou_loss.1} parent=5 // pred_check_branch
      %120 = sbr.rel (%p118) target = $region16
    $region15: #{dice_bce_iou_loss.1} parent=5 // pred_region
      // Predicated region
      $region17: #{dice_bce_iou_loss.1} parent=15 // pred_check
        %p121 = pneg %p42
      $region18: #{dice_bce_iou_loss.1} parent=15 // pred_check_branch
        %123 = sbr.rel (%p121) target = $region20
      $region19: #{dice_bce_iou_loss.1} parent=15 // pred_region
        %p124 = scmp.lt.s32.totalorder %s15, 1
        %s125 = scalar_select %p124, %s15, 1
        %p126 = scmp.lt.s32.totalorder %s16, 0
        %s127 = scalar_select %p126, %s16, 0
        %s128 = sadd.s32 %s127, %s125
        %s129 = smul.addr %s128, 8
        %s130 = scalar_lea.vmem %s0, %s129
      $region20: #{dice_bce_iou_loss.1} parent=15 // pred_fallthru
        _
      // Predicated region
      $region21: #{dice_bce_iou_loss.1} parent=15 // pred_check
        %p131 = pneg %p70
      $region22: #{dice_bce_iou_loss.1} parent=15 // pred_check_branch
        %133 = sbr.rel (%p131) target = $region24
      $region23: #{dice_bce_iou_loss.1} parent=15 // pred_region
        %p134 = scmp.lt.s32.totalorder %s15, 1
        %s135 = scalar_select %p134, %s15, 1
        %p136 = scmp.lt.s32.totalorder %s16, 0
        %s137 = scalar_select %p136, %s16, 0
        %s138 = sadd.s32 %s137, %s135
        %s139 = smul.addr %s138, 8
        %s140 = scalar_lea.vmem %s1, %s139
      $region24: #{dice_bce_iou_loss.1} parent=15 // pred_fallthru
        _
    $region16: #{dice_bce_iou_loss.1} parent=5 // pred_fallthru
      _
    %p141 = scmp.le.s32.totalorder 1, %s8
    %p142 = scmp.lt.s32.totalorder %s8, 3
    %p143 = pnand %p141, %p142
    %p144 = pneg %p143
    // Predicated region
    $region25: #{dice_bce_iou_loss.1} parent=5 // pred_check
      _
    $region26: #{dice_bce_iou_loss.1} parent=5 // pred_check_branch
      %146 = sbr.rel (%p143) target = $region28
    $region27: #{dice_bce_iou_loss.1} parent=5 // pred_region
      %s147 = ssub.s32 %s8, 1
      %p148 = scmp.lt.s32.totalorder %s17, 1
      %s149 = scalar_select %p148, %s17, 1
      %p150 = scmp.lt.s32.totalorder %s18, 0
      %s151 = scalar_select %p150, %s18, 0
      %s152 = sadd.s32 %s151, %s149
      %s153 = smul.addr %s152, 8
      %s154 = scalar_lea.vmem %s0, %s153
      %p155 = pneg %p48
      %p156 = pneg %p45
      %p157 = scmp.lt.s32.totalorder %s17, 1
      %s158 = scalar_select %p157, %s17, 1
      %p159 = scmp.lt.s32.totalorder %s18, 0
      %s160 = scalar_select %p159, %s18, 0
      %s161 = sadd.s32 %s160, %s158
      %s162 = smul.addr %s161, 8
      %s163 = scalar_lea.vmem %s1, %s162
      %p164 = pneg %p76
      %p165 = pneg %p73
      %p166 = pneg %p102
      %p167 = pneg %p99
      %p168 = scmp.lt.s32.totalorder %s17, 1
      %s169 = scalar_select %p168, %s17, 1
      %s170 = smul.addr %s169, 8
      %s171 = scalar_lea.vmem %s2, %s170
      %p172 = scmp.lt.s32.totalorder %s17, 1
      %s173 = scalar_select %p172, %s17, 1
      %p174 = scmp.lt.s32.totalorder %s18, 0
      %s175 = scalar_select %p174, %s18, 0
      %s176 = sadd.s32 %s175, %s173
      %s177 = smul.addr %s176, 8
      %s178 = scalar_lea.vmem %s0, %s177
      %p179 = scmp.lt.s32.totalorder %s17, 1
      %s180 = scalar_select %p179, %s17, 1
      %p181 = scmp.lt.s32.totalorder %s18, 0
      %s182 = scalar_select %p181, %s18, 0
      %s183 = sadd.s32 %s182, %s180
      %s184 = smul.addr %s183, 8
      %s185 = scalar_lea.vmem %s1, %s184
      %p186 = scmp.lt.s32.totalorder %s17, 1
      %s187 = scalar_select %p186, %s17, 1
      %s188 = smul.addr %s187, 8
      %s189 = scalar_lea.vmem %s2, %s188
      %p190 = scmp.eq.s32.totalorder %s18, 0
      // Predicated region
      $region29: #{dice_bce_iou_loss.1} parent=27 // pred_check
        %p191 = pneg %p190
      $region30: #{dice_bce_iou_loss.1} parent=27 // pred_check_branch
        %193 = sbr.rel (%p191) target = $region32
      $region31: #{dice_bce_iou_loss.1} parent=27 // pred_region
        %194 = vst [vmem:[%s189] sm:$0xff] 0.0
      $region32: #{dice_bce_iou_loss.1} parent=27 // pred_fallthru
        _
      %v195 = vld [vmem:[%s178] sm:$0xff]
      %v196 = vld [vmem:[%s185] sm:$0xff]
      %s197 = smul.u32 %s17, 8
      %s198 = smul.u32 %s18, 8
      %s199 = sadd.s32 %s197, %s198
      %v200 = vlaneseq
      %v201 = vshrl.u32 %v200, 7
      %v202 = vlaneseq
      %v203 = vand.u32 %v202, 127
      %v204 = vstv %s199
      %v205 = vadd.s32 %v204, %v201
      %v206 = vmul.u32 %v205, 128
      %v207 = vadd.s32 %v206, %v203
      %vm208 = vcmp.lt.s32.totalorder %v207, 2048
      %v209 = vsel %vm208, 1, 0
      %v210 = vcvt.s32.f32 %v209
      %v211 = vsel %vm208, %v195, 0.0
      %v212 = vsel %vm208, %v196, 0.0
      %v213 = vsub.f32 0.0, %v211
      %v214 = vmul.f32 %v213, 1.442695
      %v215 = vpow.pop %v214
      %v216 = vadd.f32 %v215, 1.0
      %v217 = vrcp.pop %v216
      %v218 = vmul.f32 1.0, %v217
      %v219 = vlog2.pop %v218
      %v220 = vmul.f32 %v219, 0.6931472
      %v221 = vmax.f32 %v220, -100.0
      %v222 = vsub.f32 0.0, %v218
      %v223 = vadd.f32 %v222, 1.0
      %v224 = vlog2.pop %v223
      %v225 = vmul.f32 %v224, 0.6931472
      %v226 = vmul.f32 -0.5, %v222
      %v227 = vadd.f32 %v226, 1.0
      %v228 = vmul.f32 %v227, %v222
      %v229 = vand.u32 2147483647, %v222
      %vm230 = vcmp.lt.f32.partialorder %v229, 0.0004427343
      %v231 = vsel %vm230, %v228, %v225
      %v232 = vmax.f32 %v231, -100.0
      %v233 = vmul.f32 %v212, %v221
      %v234 = vsub.f32 1.0, %v212
      %v235 = vmul.f32 %v234, %v232
      %v236 = vadd.f32 %v233, %v235
      %v237 = vsub.f32 0.0, %v236
      %v238 = vmul.f32 %v222, 1.442695
      %v239 = vpow.pop %v238
      %v240 = vadd.f32 %v239, 1.0
      %v241 = vrcp.pop %v240
      %v242 = vmul.f32 1.0, %v241
      %v243 = vmul.f32 %v218, %v210
      %v244 = vrot.slane %v243, 4
      %v245 = vadd.f32 %v243, %v244
      %v246 = vrot.slane %v245, 2
      %v247 = vadd.f32 %v245, %v246
      %v248 = vrot.slane %v247, 1
      %v249 = vadd.f32 %v247, %v248
      %v250 = vrot.slane %v212, 4
      %v251 = vadd.f32 %v212, %v250
      %v252 = vrot.slane %v251, 2
      %v253 = vadd.f32 %v251, %v252
      %v254 = vrot.slane %v253, 1
      %v255 = vadd.f32 %v253, %v254
      %v256 = vmul.f32 %v218, %v212
      %v257 = vrot.slane %v256, 4
      %v258 = vadd.f32 %v256, %v257
      %v259 = vrot.slane %v258, 2
      %v260 = vadd.f32 %v258, %v259
      %v261 = vrot.slane %v260, 1
      %v262 = vadd.f32 %v260, %v261
      %v263 = vmul.f32 %v237, %v210
      %v264 = vrot.slane %v263, 4
      %v265 = vadd.f32 %v263, %v264
      %v266 = vrot.slane %v265, 2
      %v267 = vadd.f32 %v265, %v266
      %v268 = vrot.slane %v267, 1
      %v269 = vadd.f32 %v267, %v268
      %v270 = vmul.f32 %v242, %v210
      %v271 = vrot.slane %v270, 4
      %v272 = vadd.f32 %v270, %v271
      %v273 = vrot.slane %v272, 2
      %v274 = vadd.f32 %v272, %v273
      %v275 = vrot.slane %v274, 1
      %v276 = vadd.f32 %v274, %v275
      %v277 = vmul.f32 %v242, %v212
      %v278 = vrot.slane %v277, 4
      %v279 = vadd.f32 %v277, %v278
      %v280 = vrot.slane %v279, 2
      %v281 = vadd.f32 %v279, %v280
      %v282 = vrot.slane %v281, 1
      %v283 = vadd.f32 %v281, %v282
      %vm284 = vcmask 1040384
      %v285 = vsel %vm284, %v249, %v255
      %vm286 = vcmask 1041408
      %v287 = vsel %vm286, %v285, %v262
      %vm288 = vcmask 1042432
      %v289 = vsel %vm288, %v287, %v269
      %vm290 = vcmask 1043456
      %v291 = vsel %vm290, %v289, %v276
      %vm292 = vcmask 1044480
      %v293 = vsel %vm292, %v291, %v283
      %vm294 = vcmask 1045504
      %v295 = vsel %vm294, %v293, 0.0
      %vm296 = vcmask 1046528
      %v297 = vsel %vm296, %v295, 0.0
      %v298 = vld [vmem:[%s189] sm:$0xff]
      %v299 = vadd.f32 %v298, %v297
      %300 = vst [vmem:[%s189] sm:$0xff] %v299
      %p301 = scmp.lt.s32.totalorder %s17, 1
      %s302 = scalar_select %p301, %s17, 1
      %s303 = smul.addr %s302, 8
      %s304 = scalar_lea.vmem %s2, %s303
      // Predicated region
      $region33: #{dice_bce_iou_loss.1} parent=27 // pred_check
        %p305 = pneg %p99
      $region34: #{dice_bce_iou_loss.1} parent=27 // pred_check_branch
        %307 = sbr.rel (%p305) target = $region36
      $region35: #{dice_bce_iou_loss.1} parent=27 // pred_region
        _
      $region36: #{dice_bce_iou_loss.1} parent=27 // pred_fallthru
        _
    $region28: #{dice_bce_iou_loss.1} parent=5 // pred_fallthru
      _
    %p308 = scmp.le.s32.totalorder 2, %s8
    // Predicated region
    $region37: #{dice_bce_iou_loss.1} parent=5 // pred_check
      %p309 = pneg %p308
    $region38: #{dice_bce_iou_loss.1} parent=5 // pred_check_branch
      %311 = sbr.rel (%p309) target = $region40
    $region39: #{dice_bce_iou_loss.1} parent=5 // pred_region
      %s312 = ssub.s32 %s8, 2
      // Predicated region
      $region41: #{dice_bce_iou_loss.1} parent=39 // pred_check
        %p313 = pneg %p105
      $region42: #{dice_bce_iou_loss.1} parent=39 // pred_check_branch
        %315 = sbr.rel (%p313) target = $region44
      $region43: #{dice_bce_iou_loss.1} parent=39 // pred_region
        %p316 = scmp.lt.s32.totalorder %s19, 1
        %s317 = scalar_select %p316, %s19, 1
        %s318 = smul.addr %s317, 8
        %s319 = scalar_lea.vmem %s2, %s318
      $region44: #{dice_bce_iou_loss.1} parent=39 // pred_fallthru
        _
    $region40: #{dice_bce_iou_loss.1} parent=5 // pred_fallthru
      _
  $region6: #{dice_bce_iou_loss.1} parent=0 // loop_footer
    %s12 = sadd.s32 1, %s8
  $region7: #{dice_bce_iou_loss.1} parent=0 // loop_footer_branch
    %7 = sbr.rel target = $region3
  $region8: #{dice_bce_iou_loss.1} parent=0 // loop_exit
    _

</llo_original>
